<compile_context>
chip_gen: v7x
topology: tpu7x:2x2x1
jax: 0.10.0
libtpu: 0.0.40
codegen_flags: <defaults>
</compile_context>

<pallas_src>
import functools

import jax
import jax.numpy as jnp
from jax import lax
from jax.experimental import pallas as pl
from jax.experimental.pallas import tpu as pltpu


# --------------------------------------------------------------------------------------
# Shared MLP tail (concat-free, transposed activations)
# --------------------------------------------------------------------------------------
def _mlp_tail(u, v, w1u_ref, w1i_ref, b1_ref, w2_ref, b2_ref, w3_ref, b3_ref, o_ref):
    """u, v: [TILE_B, E] gathered embeddings (table dtype, e.g. bf16).

    Activations are kept transposed (h^T = W @ x^T) so the batch dimension stays on the
    lane axis and the tiny feature dims (E, E/2, 1) sit on sublanes; the out_dim=1 layer
    is a VPU multiply + sublane reduction producing a lane-dense [1, TILE_B] row.
    """
    nt = (((1,), (1,)), ((), ()))                # contract last dims: A @ B^T on the MXU

    # ---- layer 1 (concat-free): h1^T = W1u @ u^T + W1i @ v^T + b1 -------------------
    h1 = (lax.dot_general(w1u_ref[...], u, nt, preferred_element_type=jnp.float32)
          + lax.dot_general(w1i_ref[...], v, nt, preferred_element_type=jnp.float32)
          + b1_ref[...])                         # [E, TILE_B] f32
    h1 = jnp.maximum(h1, 0.0)                    # ReLU; Dropout = identity at inference

    # ---- layer 2: h2^T = W2 @ h1^T + b2 ---------------------------------------------
    h2 = jnp.dot(w2_ref[...], h1.astype(w2_ref.dtype),
                 preferred_element_type=jnp.float32) + b2_ref[...]   # [E/2, TILE_B] f32
    h2 = jnp.maximum(h2, 0.0)                    # ReLU; Dropout = identity at inference

    # ---- layer 3 (out_dim = 1): VPU multiply + sublane reduce -> lane-dense row ------
    o_ref[...] = jnp.sum(w3_ref[...] * h2, axis=0, keepdims=True) + b3_ref[...]


# --------------------------------------------------------------------------------------
# Path A: VMEM-resident tables, one-hot MXU gather (small / medium tables)
# --------------------------------------------------------------------------------------
def mlp_resident_kernel(users_ref, items_ref,            # [TILE_B, 1] int32 (VMEM)
                        utbl_ref, itbl_ref,              # resident tables (VMEM)
                        w1u_ref, w1i_ref, b1_ref,        # resident weights / biases
                        w2_ref, b2_ref, w3_ref, b3_ref,
                        o_ref):                          # [1, TILE_B] f32 (lane-dense)
    tile_b = users_ref.shape[0]
    cdt = utbl_ref.dtype
    n_users = utbl_ref.shape[0]
    n_items = itbl_ref.shape[0]

    ids_u = users_ref[...]                               # [TILE_B, 1] int32
    ids_i = items_ref[...]

    # Exact one-hot gather on the MXU: onehot[TILE_B, n] @ table[n, E] -> [TILE_B, E].
    oh_u = (lax.broadcasted_iota(jnp.int32, (tile_b, n_users), 1) == ids_u)
    oh_i = (lax.broadcasted_iota(jnp.int32, (tile_b, n_items), 1) == ids_i)
    oh_u = oh_u.astype(jnp.float32).astype(cdt)
    oh_i = oh_i.astype(jnp.float32).astype(cdt)
    u = jnp.dot(oh_u, utbl_ref[...], preferred_element_type=jnp.float32).astype(cdt)
    v = jnp.dot(oh_i, itbl_ref[...], preferred_element_type=jnp.float32).astype(cdt)

    _mlp_tail(u, v, w1u_ref, w1i_ref, b1_ref, w2_ref, b2_ref, w3_ref, b3_ref, o_ref)


# --------------------------------------------------------------------------------------
# Path B: fused HBM row-DMA gather, double-buffered across grid steps (large tables)
# --------------------------------------------------------------------------------------
def mlp_dma_kernel(users_ref, items_ref,            # SMEM scalar prefetch: [padded_B] int32
                   user_tbl, item_tbl,              # HBM (pl.ANY): [n_users, E], [n_items, E]
                   w1u_ref, w1i_ref, b1_ref,        # resident weights / biases (VMEM)
                   w2_ref, b2_ref, w3_ref, b3_ref,
                   o_ref,                           # [1, TILE_B] f32 (lane-dense)
                   ubuf, ibuf, sems):               # (2, TILE_B, E) x2, DMA sems (2, 2)
    tile_b = ubuf.shape[1]
    b = pl.program_id(0)
    nb = pl.num_programs(0)
    slot = b & 1
    nslot = 1 - slot

    def issue_tile(base, s):
        # Per-row async DMAs HBM -> VMEM slot `s`. Unrolled so the LLO scheduler can
        # co-issue scalar index math with the vector-misc descriptor pushes.
        def issue(i, carry):
            u_row = users_ref[base + i]
            i_row = items_ref[base + i]
            pltpu.make_async_copy(user_tbl.at[u_row], ubuf.at[s, i], sems.at[s, 0]).start()
            pltpu.make_async_copy(item_tbl.at[i_row], ibuf.at[s, i], sems.at[s, 1]).start()
            return carry
        lax.fori_loop(0, tile_b, issue, 0, unroll=8)

    # Prime the pipeline with this tile's rows on the first grid step only.
    @pl.when(b == 0)
    def _():
        issue_tile(0, 0)

    # Prefetch the NEXT tile's rows (indices already in SMEM) before waiting/computing,
    # so their DMA latency hides under this tile's matmuls.
    @pl.when(b + 1 < nb)
    def _():
        issue_tile((b + 1) * tile_b, nslot)

    # ONE aggregate wait per buffer: dummy descriptor sized to the full slot; the
    # TILE_B row copies (E elems each) sum to exactly that many bytes per semaphore.
    pltpu.make_async_copy(ubuf.at[slot], ubuf.at[slot], sems.at[slot, 0]).wait()
    pltpu.make_async_copy(ibuf.at[slot], ibuf.at[slot], sems.at[slot, 1]).wait()

    u = ubuf[slot]                                # [TILE_B, E]
    v = ibuf[slot]
    _mlp_tail(u, v, w1u_ref, w1i_ref, b1_ref, w2_ref, b2_ref, w3_ref, b3_ref, o_ref)


# --------------------------------------------------------------------------------------
# Wrapper
# --------------------------------------------------------------------------------------
def _choose_tile_b(batch):
    """Prefer wide 512-lane tiles (grid-overhead amortization, unmasked vst, full MXU N)
    but keep >= 2 grid steps when possible so both v7x TensorCores get work."""
    tb = 512
    while tb > 128 and batch <= tb:
        tb //= 2
    return tb


@functools.partial(jax.jit, static_argnames=("tile_b", "force_dma_gather"))
def mlp_forward(params, users, items, *, tile_b=None, force_dma_gather=False):
    """Fused embedding-gather + MLP. Returns torch-style `output.squeeze()`."""
    n_users, E = params["user_embedding"].shape
    n_items = params["item_embedding"].shape[0]
    tbl_dtype = params["user_embedding"].dtype
    B = users.shape[0]

    if tile_b is None:
        tile_b = _choose_tile_b(B)
    assert tile_b % 128 == 0
    nb = (B + tile_b - 1) // tile_b
    padded_b = nb * tile_b

    users_p = jnp.pad(users.astype(jnp.int32), (0, padded_b - B))
    items_p = jnp.pad(items.astype(jnp.int32), (0, padded_b - B))

    const = lambda b, *_: (0, 0)                 # weights/tables stay resident across grid
    weight_specs = [
        pl.BlockSpec((E, E), const),             # w1u
        pl.BlockSpec((E, E), const),             # w1i
        pl.BlockSpec((E, 1), const),             # b1
        pl.BlockSpec((E // 2, E), const),        # w2
        pl.BlockSpec((E // 2, 1), const),        # b2
        pl.BlockSpec((E // 2, 1), const),        # w3 (stored as a column, f32)
        pl.BlockSpec((1, 1), const),             # b3
    ]
    weight_args = (params["w1u"], params["w1i"], params["b1"],
                   params["w2"], params["b2"], params["w3"], params["b3"])
    out_shape = jax.ShapeDtypeStruct((1, padded_b), jnp.float32)

    # Resident fast path only when tables (and the one-hot) are comfortably small:
    # fits v7x's 64 MiB VMEM even with BlockSpec double-buffering.
    tbl_bytes = (n_users + n_items) * E * jnp.dtype(tbl_dtype).itemsize
    use_resident = (not force_dma_gather) and max(n_users, n_items) <= 2048 \
        and tbl_bytes <= 8 * 1024 * 1024

    if use_resident:
        grid_spec = pltpu.PrefetchScalarGridSpec(
            num_scalar_prefetch=0,
            grid=(nb,),
            in_specs=[
                pl.BlockSpec((tile_b, 1), lambda b, *_: (b, 0)),   # user ids
                pl.BlockSpec((tile_b, 1), lambda b, *_: (b, 0)),   # item ids
                pl.BlockSpec((n_users, E), const),                 # resident user table
                pl.BlockSpec((n_items, E), const),                 # resident item table
                *weight_specs,
            ],
            out_specs=pl.BlockSpec((1, tile_b), lambda b, *_: (0, b)),
        )
        out = pl.pallas_call(
            mlp_resident_kernel,
            out_shape=out_shape,
            grid_spec=grid_spec,
            compiler_params=pltpu.CompilerParams(
                dimension_semantics=("parallel",),       # megacore sharding on v7x
                vmem_limit_bytes=32 * 1024 * 1024,
            ),
        )(users_p.reshape(padded_b, 1), items_p.reshape(padded_b, 1),
          params["user_embedding"], params["item_embedding"], *weight_args)
    else:
        grid_spec = pltpu.PrefetchScalarGridSpec(
            num_scalar_prefetch=2,                       # ids in SMEM -> prefetchable gather
            grid=(nb,),
            in_specs=[
                pl.BlockSpec(memory_space=pl.ANY),       # user embedding table (HBM)
                pl.BlockSpec(memory_space=pl.ANY),       # item embedding table (HBM)
                *weight_specs,
            ],
            out_specs=pl.BlockSpec((1, tile_b), lambda b, *_: (0, b)),
            scratch_shapes=[
                pltpu.VMEM((2, tile_b, E), tbl_dtype),   # double-buffered user rows
                pltpu.VMEM((2, tile_b, E), tbl_dtype),   # double-buffered item rows
                pltpu.SemaphoreType.DMA((2, 2)),         # [slot, table]
            ],
        )
        out = pl.pallas_call(
            mlp_dma_kernel,
            out_shape=out_shape,
            grid_spec=grid_spec,
            compiler_params=pltpu.CompilerParams(
                # Cross-step prefetch makes grid iterations order-dependent.
                dimension_semantics=("arbitrary",),
                vmem_limit_bytes=32 * 1024 * 1024,
            ),
        )(users_p, items_p,
          params["user_embedding"], params["item_embedding"], *weight_args)

    return jnp.squeeze(out[:, :B])               # matches torch `.squeeze()` on [B, 1]


# --------------------------------------------------------------------------------------
# Parameters & pure-JAX reference
# --------------------------------------------------------------------------------------
def _xavier(key, out_dim, in_dim):
    bound = (6.0 / (in_dim + out_dim)) ** 0.5
    return jax.random.uniform(key, (out_dim, in_dim), jnp.float32, -bound, bound)


def init_params(key, n_users, n_items, embedding_dim, dtype=jnp.bfloat16):
    assert embedding_dim % 2 == 0
    E = embedding_dim
    k = jax.random.split(key, 5)
    w1 = _xavier(k[2], E, 2 * E)                 # torch layout [out, in]
    w2 = _xavier(k[3], E // 2, E)
    w3 = _xavier(k[4], 1, E // 2)
    return {
        "user_embedding": (0.01 * jax.random.normal(k[0], (n_users, E), jnp.float32)).astype(dtype),
        "item_embedding": (0.01 * jax.random.normal(k[1], (n_items, E), jnp.float32)).astype(dtype),
        "w1u": w1[:, :E].astype(dtype),          # user half of layer-1 weight
        "w1i": w1[:, E:].astype(dtype),          # item half of layer-1 weight
        "b1": jnp.zeros((E, 1), jnp.float32),
        "w2": w2.astype(dtype),
        "b2": jnp.zeros((E // 2, 1), jnp.float32),
        "w3": jnp.asarray(w3.T, jnp.float32),    # [E/2, 1] column, f32 (VPU/XLU path)
        "b3": jnp.zeros((1, 1), jnp.float32),
    }


def reference_forward(params, users, items):
    """Pure-JAX reference of the torch forward (eval mode).

    Splitting W1 into user/item halves is algebraically identical to
    `cat([u, v], -1) @ W1^T`; the bf16/f32 mixed precision mirrors the kernel."""
    u = params["user_embedding"][users]          # [B, E]
    v = params["item_embedding"][items]
    nt = (((1,), (1,)), ((), ()))
    h1 = (lax.dot_general(params["w1u"], u, nt, preferred_element_type=jnp.float32)
          + lax.dot_general(params["w1i"], v, nt, preferred_element_type=jnp.float32)
          + params["b1"])
    h1 = jnp.maximum(h1, 0.0)
    h2 = jnp.dot(params["w2"], h1.astype(params["w2"].dtype),
                 preferred_element_type=jnp.float32) + params["b2"]
    h2 = jnp.maximum(h2, 0.0)
    out = jnp.sum(params["w3"] * h2, axis=0, keepdims=True) + params["b3"]
    return jnp.squeeze(out)


if __name__ == "__main__":
    n_users, n_items, embedding_dim = 16, 16, 32

    key = jax.random.PRNGKey(0)
    pkey, ukey, ikey, u2key, i2key = jax.random.split(key, 5)
    params = init_params(pkey, n_users, n_items, embedding_dim)

    # --- Path A: VMEM-resident tables, one-hot MXU gather (small tables, batch=8) -----
    batch = 8
    users = jax.random.randint(ukey, (batch,), 0, n_users, dtype=jnp.int32)
    items = jax.random.randint(ikey, (batch,), 0, n_items, dtype=jnp.int32)
    out = jax.block_until_ready(mlp_forward(params, users, items))
    ref = reference_forward(params, users, items)
    assert out.shape == (batch,), out.shape
    assert jnp.allclose(out, ref, atol=1e-5, rtol=1e-4), (out, ref)

    # --- Path B: HBM DMA gather, double-buffered + aggregate waits (>= 2 grid steps) --
    batch2 = 300
    users2 = jax.random.randint(u2key, (batch2,), 0, n_users, dtype=jnp.int32)
    items2 = jax.random.randint(i2key, (batch2,), 0, n_items, dtype=jnp.int32)
    out2 = jax.block_until_ready(
        mlp_forward(params, users2, items2, force_dma_gather=True))
    ref2 = reference_forward(params, users2, items2)
    assert out2.shape == (batch2,), out2.shape
    assert jnp.allclose(out2, ref2, atol=1e-5, rtol=1e-4), (out2, ref2)

    print("KERNEL_OK")
</pallas_src>

<mosaic_0001>
module attributes {stable_mosaic.version = 11 : i64} {
  func.func @mlp_resident_kernel(%arg0: i32, %arg1: memref<128x1xi32, #tpu.memory_space<vmem>>, %arg2: memref<128x1xi32, #tpu.memory_space<vmem>>, %arg3: memref<16x32xbf16, #tpu.memory_space<vmem>>, %arg4: memref<16x32xbf16, #tpu.memory_space<vmem>>, %arg5: memref<32x32xbf16, #tpu.memory_space<vmem>>, %arg6: memref<32x32xbf16, #tpu.memory_space<vmem>>, %arg7: memref<32x1xf32, #tpu.memory_space<vmem>>, %arg8: memref<16x32xbf16, #tpu.memory_space<vmem>>, %arg9: memref<16x1xf32, #tpu.memory_space<vmem>>, %arg10: memref<16x1xf32, #tpu.memory_space<vmem>>, %arg11: memref<1x1xf32, #tpu.memory_space<vmem>>, %arg12: memref<1x128xf32, #tpu.memory_space<vmem>>) attributes {dimension_semantics = [#tpu.dimension_semantics<parallel>], iteration_bounds = array<i64: 1>, scalar_prefetch = 0 : i64, scratch_operands = 0 : i64, tpu.core_type = #tpu.core_type<tc>, window_params = [{transform_indices = @transform_0, window_bounds = array<i64: 128, 1>}, {transform_indices = @transform_1, window_bounds = array<i64: 128, 1>}, {pipeline_mode = #tpu.pipeline_mode<synchronous>, transform_indices = @transform_2, window_bounds = array<i64: 16, 32>}, {pipeline_mode = #tpu.pipeline_mode<synchronous>, transform_indices = @transform_3, window_bounds = array<i64: 16, 32>}, {pipeline_mode = #tpu.pipeline_mode<synchronous>, transform_indices = @transform_4, window_bounds = array<i64: 32, 32>}, {pipeline_mode = #tpu.pipeline_mode<synchronous>, transform_indices = @transform_5, window_bounds = array<i64: 32, 32>}, {pipeline_mode = #tpu.pipeline_mode<synchronous>, transform_indices = @transform_6, window_bounds = array<i64: 32, 1>}, {pipeline_mode = #tpu.pipeline_mode<synchronous>, transform_indices = @transform_7, window_bounds = array<i64: 16, 32>}, {pipeline_mode = #tpu.pipeline_mode<synchronous>, transform_indices = @transform_8, window_bounds = array<i64: 16, 1>}, {pipeline_mode = #tpu.pipeline_mode<synchronous>, transform_indices = @transform_9, window_bounds = array<i64: 16, 1>}, {pipeline_mode = #tpu.pipeline_mode<synchronous>, transform_indices = @transform_10, window_bounds = array<i64: 1, 1>}, {transform_indices = @transform_11, window_bounds = array<i64: 1, 128>}]} {
    %c0 = arith.constant 0 : index
    %c0_0 = arith.constant 0 : index
    %0 = vector.load %arg1[%c0, %c0_0] : memref<128x1xi32, #tpu.memory_space<vmem>>, vector<128x1xi32>
    %c0_1 = arith.constant 0 : index
    %c0_2 = arith.constant 0 : index
    %1 = vector.load %arg2[%c0_1, %c0_2] : memref<128x1xi32, #tpu.memory_space<vmem>>, vector<128x1xi32>
    %2 = tpu.iota {dimensions = array<i32: 1>} : vector<128x16xi32>
    %3 = vector.broadcast %0 : vector<128x1xi32> to vector<128x16xi32>
    %4 = arith.cmpi eq, %2, %3 : vector<128x16xi32>
    %5 = tpu.iota {dimensions = array<i32: 1>} : vector<128x16xi32>
    %6 = vector.broadcast %1 : vector<128x1xi32> to vector<128x16xi32>
    %7 = arith.cmpi eq, %5, %6 : vector<128x16xi32>
    %8 = arith.extui %4 : vector<128x16xi1> to vector<128x16xi32>
    %9 = arith.sitofp %8 : vector<128x16xi32> to vector<128x16xf32>
    %10 = arith.truncf %9 : vector<128x16xf32> to vector<128x16xbf16>
    %11 = arith.extui %7 : vector<128x16xi1> to vector<128x16xi32>
    %12 = arith.sitofp %11 : vector<128x16xi32> to vector<128x16xf32>
    %13 = arith.truncf %12 : vector<128x16xf32> to vector<128x16xbf16>
    %c0_3 = arith.constant 0 : index
    %c0_4 = arith.constant 0 : index
    %14 = vector.load %arg3[%c0_3, %c0_4] : memref<16x32xbf16, #tpu.memory_space<vmem>>, vector<16x32xbf16>
    %cst = arith.constant dense<0.000000e+00> : vector<128x32xf32>
    %15 = tpu.matmul %10, %14, %cst {dimension_numbers = #tpu.dot_dimension_numbers<[1], [0], [0], [1], [0, 0, 1, 1], [], []>} : vector<128x16xbf16>, vector<16x32xbf16>, vector<128x32xf32> -> vector<128x32xf32>
    %16 = arith.truncf %15 : vector<128x32xf32> to vector<128x32xbf16>
    %c0_5 = arith.constant 0 : index
    %c0_6 = arith.constant 0 : index
    %17 = vector.load %arg4[%c0_5, %c0_6] : memref<16x32xbf16, #tpu.memory_space<vmem>>, vector<16x32xbf16>
    %cst_7 = arith.constant dense<0.000000e+00> : vector<128x32xf32>
    %18 = tpu.matmul %13, %17, %cst_7 {dimension_numbers = #tpu.dot_dimension_numbers<[1], [0], [0], [1], [0, 0, 1, 1], [], []>} : vector<128x16xbf16>, vector<16x32xbf16>, vector<128x32xf32> -> vector<128x32xf32>
    %19 = arith.truncf %18 : vector<128x32xf32> to vector<128x32xbf16>
    %c0_8 = arith.constant 0 : index
    %c0_9 = arith.constant 0 : index
    %20 = vector.load %arg5[%c0_8, %c0_9] : memref<32x32xbf16, #tpu.memory_space<vmem>>, vector<32x32xbf16>
    %cst_10 = arith.constant dense<0.000000e+00> : vector<32x128xf32>
    %21 = tpu.matmul %20, %16, %cst_10 {dimension_numbers = #tpu.dot_dimension_numbers<[1], [1], [0], [0], [0, 0, 1, 0], [], []>} : vector<32x32xbf16>, vector<128x32xbf16>, vector<32x128xf32> -> vector<32x128xf32>
    %c0_11 = arith.constant 0 : index
    %c0_12 = arith.constant 0 : index
    %22 = vector.load %arg6[%c0_11, %c0_12] : memref<32x32xbf16, #tpu.memory_space<vmem>>, vector<32x32xbf16>
    %cst_13 = arith.constant dense<0.000000e+00> : vector<32x128xf32>
    %23 = tpu.matmul %22, %19, %cst_13 {dimension_numbers = #tpu.dot_dimension_numbers<[1], [1], [0], [0], [0, 0, 1, 0], [], []>} : vector<32x32xbf16>, vector<128x32xbf16>, vector<32x128xf32> -> vector<32x128xf32>
    %24 = arith.addf %21, %23 : vector<32x128xf32>
    %c0_14 = arith.constant 0 : index
    %c0_15 = arith.constant 0 : index
    %25 = vector.load %arg7[%c0_14, %c0_15] : memref<32x1xf32, #tpu.memory_space<vmem>>, vector<32x1xf32>
    %26 = vector.broadcast %25 : vector<32x1xf32> to vector<32x128xf32>
    %27 = arith.addf %24, %26 : vector<32x128xf32>
    %cst_16 = arith.constant 0.000000e+00 : f32
    %28 = vector.broadcast %cst_16 : f32 to vector<32x128xf32>
    %29 = arith.maximumf %27, %28 : vector<32x128xf32>
    %c0_17 = arith.constant 0 : index
    %c0_18 = arith.constant 0 : index
    %30 = vector.load %arg8[%c0_17, %c0_18] : memref<16x32xbf16, #tpu.memory_space<vmem>>, vector<16x32xbf16>
    %31 = arith.truncf %29 : vector<32x128xf32> to vector<32x128xbf16>
    %cst_19 = arith.constant dense<0.000000e+00> : vector<16x128xf32>
    %32 = tpu.matmul %30, %31, %cst_19 {dimension_numbers = #tpu.dot_dimension_numbers<[1], [0], [0], [1], [0, 0, 1, 1], [], []>} : vector<16x32xbf16>, vector<32x128xbf16>, vector<16x128xf32> -> vector<16x128xf32>
    %c0_20 = arith.constant 0 : index
    %c0_21 = arith.constant 0 : index
    %33 = vector.load %arg9[%c0_20, %c0_21] : memref<16x1xf32, #tpu.memory_space<vmem>>, vector<16x1xf32>
    %34 = vector.broadcast %33 : vector<16x1xf32> to vector<16x128xf32>
    %35 = arith.addf %32, %34 : vector<16x128xf32>
    %cst_22 = arith.constant 0.000000e+00 : f32
    %36 = vector.broadcast %cst_22 : f32 to vector<16x128xf32>
    %37 = arith.maximumf %35, %36 : vector<16x128xf32>
    %c0_23 = arith.constant 0 : index
    %c0_24 = arith.constant 0 : index
    %38 = vector.load %arg10[%c0_23, %c0_24] : memref<16x1xf32, #tpu.memory_space<vmem>>, vector<16x1xf32>
    %39 = vector.broadcast %38 : vector<16x1xf32> to vector<16x128xf32>
    %40 = arith.mulf %39, %37 : vector<16x128xf32>
    %cst_25 = arith.constant dense<0.000000e+00> : vector<128xf32>
    %41 = vector.multi_reduction <add>, %40, %cst_25 [0] : vector<16x128xf32> to vector<128xf32>
    %42 = vector.shape_cast %41 : vector<128xf32> to vector<1x128xf32>
    %c0_26 = arith.constant 0 : index
    %c0_27 = arith.constant 0 : index
    %43 = vector.load %arg11[%c0_26, %c0_27] : memref<1x1xf32, #tpu.memory_space<vmem>>, vector<1x1xf32>
    %44 = vector.broadcast %43 : vector<1x1xf32> to vector<1x128xf32>
    %45 = arith.addf %42, %44 : vector<1x128xf32>
    %c0_28 = arith.constant 0 : index
    %c0_29 = arith.constant 0 : index
    %46 = vector.load %arg12[%c0_28, %c0_29] : memref<1x128xf32, #tpu.memory_space<vmem>>, vector<1x128xf32>
    tpu.vector_store %arg12[%c0_28, %c0_29], %45 {strides = array<i32>} : memref<1x128xf32, #tpu.memory_space<vmem>>, vector<1x128xf32>,
    return
  }
  func.func @transform_0(%arg0: i32) -> (i32, i32) {
    %c0_i32 = arith.constant 0 : i32
    %c0_i32_0 = arith.constant 0 : i32
    return %arg0, %c0_i32 : i32, i32
  }
  func.func @transform_1(%arg0: i32) -> (i32, i32) {
    %c0_i32 = arith.constant 0 : i32
    %c0_i32_0 = arith.constant 0 : i32
    return %arg0, %c0_i32 : i32, i32
  }
  func.func @transform_2(%arg0: i32) -> (i32, i32) {
    %c0_i32 = arith.constant 0 : i32
    %c0_i32_0 = arith.constant 0 : i32
    %c0_i32_1 = arith.constant 0 : i32
    return %c0_i32, %c0_i32_0 : i32, i32
  }
  func.func @transform_3(%arg0: i32) -> (i32, i32) {
    %c0_i32 = arith.constant 0 : i32
    %c0_i32_0 = arith.constant 0 : i32
    %c0_i32_1 = arith.constant 0 : i32
    return %c0_i32, %c0_i32_0 : i32, i32
  }
  func.func @transform_4(%arg0: i32) -> (i32, i32) {
    %c0_i32 = arith.constant 0 : i32
    %c0_i32_0 = arith.constant 0 : i32
    %c0_i32_1 = arith.constant 0 : i32
    return %c0_i32, %c0_i32_0 : i32, i32
  }
  func.func @transform_5(%arg0: i32) -> (i32, i32) {
    %c0_i32 = arith.constant 0 : i32
    %c0_i32_0 = arith.constant 0 : i32
    %c0_i32_1 = arith.constant 0 : i32
    return %c0_i32, %c0_i32_0 : i32, i32
  }
  func.func @transform_6(%arg0: i32) -> (i32, i32) {
    %c0_i32 = arith.constant 0 : i32
    %c0_i32_0 = arith.constant 0 : i32
    %c0_i32_1 = arith.constant 0 : i32
    return %c0_i32, %c0_i32_0 : i32, i32
  }
  func.func @transform_7(%arg0: i32) -> (i32, i32) {
    %c0_i32 = arith.constant 0 : i32
    %c0_i32_0 = arith.constant 0 : i32
    %c0_i32_1 = arith.constant 0 : i32
    return %c0_i32, %c0_i32_0 : i32, i32
  }
  func.func @transform_8(%arg0: i32) -> (i32, i32) {
    %c0_i32 = arith.constant 0 : i32
    %c0_i32_0 = arith.constant 0 : i32
    %c0_i32_1 = arith.constant 0 : i32
    return %c0_i32, %c0_i32_0 : i32, i32
  }
  func.func @transform_9(%arg0: i32) -> (i32, i32) {
    %c0_i32 = arith.constant 0 : i32
    %c0_i32_0 = arith.constant 0 : i32
    %c0_i32_1 = arith.constant 0 : i32
    return %c0_i32, %c0_i32_0 : i32, i32
  }
  func.func @transform_10(%arg0: i32) -> (i32, i32) {
    %c0_i32 = arith.constant 0 : i32
    %c0_i32_0 = arith.constant 0 : i32
    %c0_i32_1 = arith.constant 0 : i32
    return %c0_i32, %c0_i32_0 : i32, i32
  }
  func.func @transform_11(%arg0: i32) -> (i32, i32) {
    %c0_i32 = arith.constant 0 : i32
    %c0_i32_0 = arith.constant 0 : i32
    return %c0_i32, %arg0 : i32, i32
  }
}

</mosaic_0001>

<llo_original>
// kernel: mlp_forward.1
$region0: #{mlp_forward.1}
  #allocation0 [shape = 'u32[]', space=smem, size = 0x4, offset = 0x4, fixed_abs, tag = 'smem constant byte address 0x4 - core index']
  #allocation1 [shape = 'u32[144,128]{1,0:T(1,128)}', space=vmem, size = 0x12000, scoped, tag = 'internal scratch']
  #allocation2 [shape = 'f32[1,1]{1,0:T(1,128)S(1)}', space=vmem, size = 0x200, scoped, tag = 'scoped memory for mlp_forward.1']
  %s0 = inlined_call_operand.vmem [shape: s32[128,1], index: 0, kind: input, shape index: {}]
  %s1 = inlined_call_operand.vmem [shape: s32[128,1], index: 1, kind: input, shape index: {}]
  %s2 = inlined_call_operand.vmem [shape: bf16[16,32], index: 2, kind: input, shape index: {}]
  %s3 = inlined_call_operand.vmem [shape: bf16[16,32], index: 3, kind: input, shape index: {}]
  %s4 = inlined_call_operand.vmem [shape: bf16[32,32], index: 4, kind: input, shape index: {}]
  %s5 = inlined_call_operand.vmem [shape: bf16[32,32], index: 5, kind: input, shape index: {}]
  %s6 = inlined_call_operand.vmem [shape: f32[32,1], index: 6, kind: input, shape index: {}]
  %s7 = inlined_call_operand.vmem [shape: bf16[16,32], index: 7, kind: input, shape index: {}]
  %s8 = inlined_call_operand.vmem [shape: f32[16,1], index: 8, kind: input, shape index: {}]
  %s9 = inlined_call_operand.vmem [shape: f32[16,1], index: 9, kind: input, shape index: {}]
  %s10 = inlined_call_operand.<no memory space> [shape: f32[1,1], index: 10, kind: input, shape index: {}]
  %s11 = inlined_call_operand.vmem [shape: f32[1,128], index: 11, kind: output, shape index: {}]
  %s12 = sld [smem:[#allocation0]]
  $region54: #{mlp_forward.1} parent=0
    _
  %s14 = ssub.s32 1, %s12
  %s15 = scalar_select 0, %s14, %s12
  %v16 = vstv %s10
  %17 = vst [vmem:[#allocation2] sm:$0x1] %v16
  // Predicated region
  $region2: #{mlp_forward.1} parent=0 // pred_check
    _
  $region3: #{mlp_forward.1} parent=0 // pred_check_branch
    %19 = sbr.rel (0) target = $region5
  $region4: #{mlp_forward.1} parent=0 // pred_region
    _
  $region5: #{mlp_forward.1} parent=0 // pred_fallthru
    _
  // Predicated region
  $region6: #{mlp_forward.1} parent=0 // pred_check
    _
  $region7: #{mlp_forward.1} parent=0 // pred_check_branch
    %21 = sbr.rel (0) target = $region9
  $region8: #{mlp_forward.1} parent=0 // pred_region
    _
  $region9: #{mlp_forward.1} parent=0 // pred_fallthru
    _
  // Predicated region
  $region10: #{mlp_forward.1} parent=0 // pred_check
    _
  $region11: #{mlp_forward.1} parent=0 // pred_check_branch
    %23 = sbr.rel (0) target = $region13
  $region12: #{mlp_forward.1} parent=0 // pred_region
    _
  $region13: #{mlp_forward.1} parent=0 // pred_fallthru
    _
  // Predicated region
  $region14: #{mlp_forward.1} parent=0 // pred_check
    _
  $region15: #{mlp_forward.1} parent=0 // pred_check_branch
    %25 = sbr.rel (0) target = $region17
  $region16: #{mlp_forward.1} parent=0 // pred_region
    _
  $region17: #{mlp_forward.1} parent=0 // pred_fallthru
    _
  // Predicated region
  $region18: #{mlp_forward.1} parent=0 // pred_check
    _
  $region19: #{mlp_forward.1} parent=0 // pred_check_branch
    %27 = sbr.rel (0) target = $region21
  $region20: #{mlp_forward.1} parent=0 // pred_region
    _
  $region21: #{mlp_forward.1} parent=0 // pred_fallthru
    _
  // Predicated region
  $region22: #{mlp_forward.1} parent=0 // pred_check
    _
  $region23: #{mlp_forward.1} parent=0 // pred_check_branch
    %29 = sbr.rel (0) target = $region25
  $region24: #{mlp_forward.1} parent=0 // pred_region
    _
  $region25: #{mlp_forward.1} parent=0 // pred_fallthru
    _
  // Predicated region
  $region26: #{mlp_forward.1} parent=0 // pred_check
    _
  $region27: #{mlp_forward.1} parent=0 // pred_check_branch
    %31 = sbr.rel (0) target = $region29
  $region28: #{mlp_forward.1} parent=0 // pred_region
    _
  $region29: #{mlp_forward.1} parent=0 // pred_fallthru
    _
  // Predicated region
  $region30: #{mlp_forward.1} parent=0 // pred_check
    _
  $region31: #{mlp_forward.1} parent=0 // pred_check_branch
    %33 = sbr.rel (0) target = $region33
  $region32: #{mlp_forward.1} parent=0 // pred_region
    _
  $region33: #{mlp_forward.1} parent=0 // pred_fallthru
    _
  // Predicated region
  $region34: #{mlp_forward.1} parent=0 // pred_check
    _
  $region35: #{mlp_forward.1} parent=0 // pred_check_branch
    %35 = sbr.rel (0) target = $region37
  $region36: #{mlp_forward.1} parent=0 // pred_region
    _
  $region37: #{mlp_forward.1} parent=0 // pred_fallthru
    _
  // Predicated region
  $region38: #{mlp_forward.1} parent=0 // pred_check
    _
  $region39: #{mlp_forward.1} parent=0 // pred_check_branch
    %37 = sbr.rel (0) target = $region41
  $region40: #{mlp_forward.1} parent=0 // pred_region
    _
  $region41: #{mlp_forward.1} parent=0 // pred_fallthru
    _
  // Predicated region
  $region42: #{mlp_forward.1} parent=0 // pred_check
    _
  $region43: #{mlp_forward.1} parent=0 // pred_check_branch
    %39 = sbr.rel (0) target = $region45
  $region44: #{mlp_forward.1} parent=0 // pred_region
    _
  $region45: #{mlp_forward.1} parent=0 // pred_fallthru
    _
  %v41 = vld [vmem:[%s0] sm:$0xff]
  %v42 = vld [vmem:[%s0 + $0x8] sm:$0xff]
  %v43 = vld [vmem:[%s0 + $0x10] sm:$0xff]
  %v44 = vld [vmem:[%s0 + $0x18] sm:$0xff]
  %v45 = vld [vmem:[%s0 + $0x20] sm:$0xff]
  %v46 = vld [vmem:[%s0 + $0x28] sm:$0xff]
  %v47 = vld [vmem:[%s0 + $0x30] sm:$0xff]
  %v48 = vld [vmem:[%s0 + $0x38] sm:$0xff]
  %v49 = vld [vmem:[%s0 + $0x40] sm:$0xff]
  %v50 = vld [vmem:[%s0 + $0x48] sm:$0xff]
  %v51 = vld [vmem:[%s0 + $0x50] sm:$0xff]
  %v52 = vld [vmem:[%s0 + $0x58] sm:$0xff]
  %v53 = vld [vmem:[%s0 + $0x60] sm:$0xff]
  %v54 = vld [vmem:[%s0 + $0x68] sm:$0xff]
  %v55 = vld [vmem:[%s0 + $0x70] sm:$0xff]
  %v56 = vld [vmem:[%s0 + $0x78] sm:$0xff]
  %v57 = vld [vmem:[%s1] sm:$0xff]
  %v58 = vld [vmem:[%s1 + $0x8] sm:$0xff]
  %v59 = vld [vmem:[%s1 + $0x10] sm:$0xff]
  %v60 = vld [vmem:[%s1 + $0x18] sm:$0xff]
  %v61 = vld [vmem:[%s1 + $0x20] sm:$0xff]
  %v62 = vld [vmem:[%s1 + $0x28] sm:$0xff]
  %v63 = vld [vmem:[%s1 + $0x30] sm:$0xff]
  %v64 = vld [vmem:[%s1 + $0x38] sm:$0xff]
  %v65 = vld [vmem:[%s1 + $0x40] sm:$0xff]
  %v66 = vld [vmem:[%s1 + $0x48] sm:$0xff]
  %v67 = vld [vmem:[%s1 + $0x50] sm:$0xff]
  %v68 = vld [vmem:[%s1 + $0x58] sm:$0xff]
  %v69 = vld [vmem:[%s1 + $0x60] sm:$0xff]
  %v70 = vld [vmem:[%s1 + $0x68] sm:$0xff]
  %v71 = vld [vmem:[%s1 + $0x70] sm:$0xff]
  %v72 = vld [vmem:[%s1 + $0x78] sm:$0xff]
  %v73 = vlaneseq
  %v74 = vand.u32 %v73, 127
  %75 = vset.pattern.permute.xlu0 0
  %76 = vperm.xlu0 %75, %v41
  %v77 = vpop.permute.xlu0 %76
  %78 = vset.pattern.permute.xlu0 0
  %79 = vperm.xlu0 %78, %v42
  %v80 = vpop.permute.xlu0 %79
  %81 = vset.pattern.permute.xlu0 0
  %82 = vperm.xlu0 %81, %v43
  %v83 = vpop.permute.xlu0 %82
  %84 = vset.pattern.permute.xlu0 0
  %85 = vperm.xlu0 %84, %v44
  %v86 = vpop.permute.xlu0 %85
  %87 = vset.pattern.permute.xlu0 0
  %88 = vperm.xlu0 %87, %v45
  %v89 = vpop.permute.xlu0 %88
  %90 = vset.pattern.permute.xlu0 0
  %91 = vperm.xlu0 %90, %v46
  %v92 = vpop.permute.xlu0 %91
  %93 = vset.pattern.permute.xlu0 0
  %94 = vperm.xlu0 %93, %v47
  %v95 = vpop.permute.xlu0 %94
  %96 = vset.pattern.permute.xlu0 0
  %97 = vperm.xlu0 %96, %v48
  %v98 = vpop.permute.xlu0 %97
  %99 = vset.pattern.permute.xlu0 0
  %100 = vperm.xlu0 %99, %v49
  %v101 = vpop.permute.xlu0 %100
  %102 = vset.pattern.permute.xlu0 0
  %103 = vperm.xlu0 %102, %v50
  %v104 = vpop.permute.xlu0 %103
  %105 = vset.pattern.permute.xlu0 0
  %106 = vperm.xlu0 %105, %v51
  %v107 = vpop.permute.xlu0 %106
  %108 = vset.pattern.permute.xlu0 0
  %109 = vperm.xlu0 %108, %v52
  %v110 = vpop.permute.xlu0 %109
  %111 = vset.pattern.permute.xlu0 0
  %112 = vperm.xlu0 %111, %v53
  %v113 = vpop.permute.xlu0 %112
  %114 = vset.pattern.permute.xlu0 0
  %115 = vperm.xlu0 %114, %v54
  %v116 = vpop.permute.xlu0 %115
  %117 = vset.pattern.permute.xlu0 0
  %118 = vperm.xlu0 %117, %v55
  %v119 = vpop.permute.xlu0 %118
  %120 = vset.pattern.permute.xlu0 0
  %121 = vperm.xlu0 %120, %v56
  %v122 = vpop.permute.xlu0 %121
  %vm123 = vcmp.eq.s32.totalorder %v74, %v77
  %vm124 = vcmp.eq.s32.totalorder %v74, %v80
  %vm125 = vcmp.eq.s32.totalorder %v74, %v83
  %vm126 = vcmp.eq.s32.totalorder %v74, %v86
  %vm127 = vcmp.eq.s32.totalorder %v74, %v89
  %vm128 = vcmp.eq.s32.totalorder %v74, %v92
  %vm129 = vcmp.eq.s32.totalorder %v74, %v95
  %vm130 = vcmp.eq.s32.totalorder %v74, %v98
  %vm131 = vcmp.eq.s32.totalorder %v74, %v101
  %vm132 = vcmp.eq.s32.totalorder %v74, %v104
  %vm133 = vcmp.eq.s32.totalorder %v74, %v107
  %vm134 = vcmp.eq.s32.totalorder %v74, %v110
  %vm135 = vcmp.eq.s32.totalorder %v74, %v113
  %vm136 = vcmp.eq.s32.totalorder %v74, %v116
  %vm137 = vcmp.eq.s32.totalorder %v74, %v119
  %vm138 = vcmp.eq.s32.totalorder %v74, %v122
  %139 = vset.pattern.permute.xlu0 0
  %140 = vperm.xlu0 %139, %v57
  %v141 = vpop.permute.xlu0 %140
  %142 = vset.pattern.permute.xlu0 0
  %143 = vperm.xlu0 %142, %v58
  %v144 = vpop.permute.xlu0 %143
  %145 = vset.pattern.permute.xlu0 0
  %146 = vperm.xlu0 %145, %v59
  %v147 = vpop.permute.xlu0 %146
  %148 = vset.pattern.permute.xlu0 0
  %149 = vperm.xlu0 %148, %v60
  %v150 = vpop.permute.xlu0 %149
  %151 = vset.pattern.permute.xlu0 0
  %152 = vperm.xlu0 %151, %v61
  %v153 = vpop.permute.xlu0 %152
  %154 = vset.pattern.permute.xlu0 0
  %155 = vperm.xlu0 %154, %v62
  %v156 = vpop.permute.xlu0 %155
  %157 = vset.pattern.permute.xlu0 0
  %158 = vperm.xlu0 %157, %v63
  %v159 = vpop.permute.xlu0 %158
  %160 = vset.pattern.permute.xlu0 0
  %161 = vperm.xlu0 %160, %v64
  %v162 = vpop.permute.xlu0 %161
  %163 = vset.pattern.permute.xlu0 0
  %164 = vperm.xlu0 %163, %v65
  %v165 = vpop.permute.xlu0 %164
  %166 = vset.pattern.permute.xlu0 0
  %167 = vperm.xlu0 %166, %v66
  %v168 = vpop.permute.xlu0 %167
  %169 = vset.pattern.permute.xlu0 0
  %170 = vperm.xlu0 %169, %v67
  %v171 = vpop.permute.xlu0 %170
  %172 = vset.pattern.permute.xlu0 0
  %173 = vperm.xlu0 %172, %v68
  %v174 = vpop.permute.xlu0 %173
  %175 = vset.pattern.permute.xlu0 0
  %176 = vperm.xlu0 %175, %v69
  %v177 = vpop.permute.xlu0 %176
  %178 = vset.pattern.permute.xlu0 0
  %179 = vperm.xlu0 %178, %v70
  %v180 = vpop.permute.xlu0 %179
  %181 = vset.pattern.permute.xlu0 0
  %182 = vperm.xlu0 %181, %v71
  %v183 = vpop.permute.xlu0 %182
  %184 = vset.pattern.permute.xlu0 0
  %185 = vperm.xlu0 %184, %v72
  %v186 = vpop.permute.xlu0 %185
  %vm187 = vcmp.eq.s32.totalorder %v74, %v141
  %vm188 = vcmp.eq.s32.totalorder %v74, %v144
  %vm189 = vcmp.eq.s32.totalorder %v74, %v147
  %vm190 = vcmp.eq.s32.totalorder %v74, %v150
  %vm191 = vcmp.eq.s32.totalorder %v74, %v153
  %vm192 = vcmp.eq.s32.totalorder %v74, %v156
  %vm193 = vcmp.eq.s32.totalorder %v74, %v159
  %vm194 = vcmp.eq.s32.totalorder %v74, %v162
  %vm195 = vcmp.eq.s32.totalorder %v74, %v165
  %vm196 = vcmp.eq.s32.totalorder %v74, %v168
  %vm197 = vcmp.eq.s32.totalorder %v74, %v171
  %vm198 = vcmp.eq.s32.totalorder %v74, %v174
  %vm199 = vcmp.eq.s32.totalorder %v74, %v177
  %vm200 = vcmp.eq.s32.totalorder %v74, %v180
  %vm201 = vcmp.eq.s32.totalorder %v74, %v183
  %vm202 = vcmp.eq.s32.totalorder %v74, %v186
  %v203 = vsel %vm123, 1, 0
  %v204 = vsel %vm124, 1, 0
  %v205 = vsel %vm125, 1, 0
  %v206 = vsel %vm126, 1, 0
  %v207 = vsel %vm127, 1, 0
  %v208 = vsel %vm128, 1, 0
  %v209 = vsel %vm129, 1, 0
  %v210 = vsel %vm130, 1, 0
  %v211 = vsel %vm131, 1, 0
  %v212 = vsel %vm132, 1, 0
  %v213 = vsel %vm133, 1, 0
  %v214 = vsel %vm134, 1, 0
  %v215 = vsel %vm135, 1, 0
  %v216 = vsel %vm136, 1, 0
  %v217 = vsel %vm137, 1, 0
  %v218 = vsel %vm138, 1, 0
  %v219 = vcvt.s32.f32 %v203
  %v220 = vcvt.s32.f32 %v204
  %v221 = vcvt.s32.f32 %v205
  %v222 = vcvt.s32.f32 %v206
  %v223 = vcvt.s32.f32 %v207
  %v224 = vcvt.s32.f32 %v208
  %v225 = vcvt.s32.f32 %v209
  %v226 = vcvt.s32.f32 %v210
  %v227 = vcvt.s32.f32 %v211
  %v228 = vcvt.s32.f32 %v212
  %v229 = vcvt.s32.f32 %v213
  %v230 = vcvt.s32.f32 %v214
  %v231 = vcvt.s32.f32 %v215
  %v232 = vcvt.s32.f32 %v216
  %v233 = vcvt.s32.f32 %v217
  %v234 = vcvt.s32.f32 %v218
  %v235 = vpack.c.bf16 %v220, %v219
  %v236 = vpack.c.bf16 %v222, %v221
  %v237 = vpack.c.bf16 %v224, %v223
  %v238 = vpack.c.bf16 %v226, %v225
  %v239 = vpack.c.bf16 %v228, %v227
  %v240 = vpack.c.bf16 %v230, %v229
  %v241 = vpack.c.bf16 %v232, %v231
  %v242 = vpack.c.bf16 %v234, %v233
  %v243 = vsel %vm187, 1, 0
  %v244 = vsel %vm188, 1, 0
  %v245 = vsel %vm189, 1, 0
  %v246 = vsel %vm190, 1, 0
  %v247 = vsel %vm191, 1, 0
  %v248 = vsel %vm192, 1, 0
  %v249 = vsel %vm193, 1, 0
  %v250 = vsel %vm194, 1, 0
  %v251 = vsel %vm195, 1, 0
  %v252 = vsel %vm196, 1, 0
  %v253 = vsel %vm197, 1, 0
  %v254 = vsel %vm198, 1, 0
  %v255 = vsel %vm199, 1, 0
  %v256 = vsel %vm200, 1, 0
  %v257 = vsel %vm201, 1, 0
  %v258 = vsel %vm202, 1, 0
  %v259 = vcvt.s32.f32 %v243
  %v260 = vcvt.s32.f32 %v244
  %v261 = vcvt.s32.f32 %v245
  %v262 = vcvt.s32.f32 %v246
  %v263 = vcvt.s32.f32 %v247
  %v264 = vcvt.s32.f32 %v248
  %v265 = vcvt.s32.f32 %v249
  %v266 = vcvt.s32.f32 %v250
  %v267 = vcvt.s32.f32 %v251
  %v268 = vcvt.s32.f32 %v252
  %v269 = vcvt.s32.f32 %v253
  %v270 = vcvt.s32.f32 %v254
  %v271 = vcvt.s32.f32 %v255
  %v272 = vcvt.s32.f32 %v256
  %v273 = vcvt.s32.f32 %v257
  %v274 = vcvt.s32.f32 %v258
  %v275 = vpack.c.bf16 %v260, %v259
  %v276 = vpack.c.bf16 %v262, %v261
  %v277 = vpack.c.bf16 %v264, %v263
  %v278 = vpack.c.bf16 %v266, %v265
  %v279 = vpack.c.bf16 %v268, %v267
  %v280 = vpack.c.bf16 %v270, %v269
  %v281 = vpack.c.bf16 %v272, %v271
  %v282 = vpack.c.bf16 %v274, %v273
  %v283 = vld [vmem:[%s2] sm:$0xf]
  %v284 = vld [vmem:[%s2 + $0x4] sm:$0xf]
  %v287 = vunpack.c.l.b16 %v283
  %v288 = vunpack.c.l.b16 %v284
  %v289 = vpack.c.b16 %v288, %v287
  %vm291 = vcmask 130048
  %v293 = vsel %vm291, %v235, 0
  %v296 = vsel %vm291, %v236, 0
  %v299 = vsel %vm291, %v237, 0
  %v302 = vsel %vm291, %v238, 0
  %v305 = vsel %vm291, %v239, 0
  %v308 = vsel %vm291, %v240, 0
  %v311 = vsel %vm291, %v241, 0
  %v314 = vsel %vm291, %v242, 0
  %316 = vmatprep.subr.bf16.mxu0 0
  %317 = vmatpush1.bf16.msra.mxu0 %v289
  %318 = vmatprep.subr.bf16.mxu0 0
  %319 = vmatpush1.bf16.msra.mxu0 0
  %320 = vmatprep.subr.bf16.mxu0 0
  %321 = vmatpush1.bf16.msra.mxu0 0
  %322 = vmatprep.subr.bf16.mxu0 0
  %323 = vmatpush1.bf16.msra.mxu0 0
  %324 = vmatprep.subr.bf16.mxu0 0
  %325 = vmatpush1.bf16.msra.mxu0 0
  %326 = vmatprep.subr.bf16.mxu0 0
  %327 = vmatpush1.bf16.msra.mxu0 0
  %328 = vmatprep.subr.bf16.mxu0 0
  %329 = vmatpush1.bf16.msra.mxu0 0
  %330 = vmatprep.subr.bf16.mxu0 0
  %331 = vmatpush1.bf16.msra.mxu0 0
  %332 = vmatprep.subr.bf16.mxu0 0
  %333 = vmatpush1.bf16.msra.mxu0 0
  %334 = vmatprep.subr.bf16.mxu0 0
  %335 = vmatpush1.bf16.msra.mxu0 0
  %336 = vmatprep.subr.bf16.mxu0 0
  %337 = vmatpush1.bf16.msra.mxu0 0
  %338 = vmatprep.subr.bf16.mxu0 0
  %339 = vmatpush1.bf16.msra.mxu0 0
  %340 = vmatprep.subr.bf16.mxu0 0
  %341 = vmatpush1.bf16.msra.mxu0 0
  %342 = vmatprep.subr.bf16.mxu0 0
  %343 = vmatpush1.bf16.msra.mxu0 0
  %344 = vmatprep.subr.bf16.mxu0 0
  %345 = vmatpush1.bf16.msra.mxu0 0
  %346 = vmatprep.subr.bf16.mxu0 0
  %347 = vmatpush1.bf16.msra.mxu0 0
  %348 = vmatprep.mubr.bf16.mxu0 0
  %349 = vmatmul.mubr.bf16.gmra.mrb[0].mxu0 %v293
  %v350 = vpop.f32.mrb[0].mxu0
  %v351 = vadd.f32 0.0, %v350
  %v352 = vpop.f32.mrb[0].mxu0
  %v353 = vpop.f32.mrb[0].mxu0
  %v354 = vadd.f32 0.0, %v353
  %v355 = vpop.f32.mrb[0].mxu0
  %356 = vmatprep.mubr.bf16.mxu0 0
  %357 = vmatmul.mubr.bf16.gmra.mrb[0].mxu0 %v296
  %v358 = vpop.f32.mrb[0].mxu0
  %v359 = vadd.f32 0.0, %v358
  %v360 = vpop.f32.mrb[0].mxu0
  %v361 = vpop.f32.mrb[0].mxu0
  %v362 = vadd.f32 0.0, %v361
  %v363 = vpop.f32.mrb[0].mxu0
  %364 = vmatprep.mubr.bf16.mxu0 0
  %365 = vmatmul.mubr.bf16.gmra.mrb[0].mxu0 %v299
  %v366 = vpop.f32.mrb[0].mxu0
  %v367 = vadd.f32 0.0, %v366
  %v368 = vpop.f32.mrb[0].mxu0
  %v369 = vpop.f32.mrb[0].mxu0
  %v370 = vadd.f32 0.0, %v369
  %v371 = vpop.f32.mrb[0].mxu0
  %372 = vmatprep.mubr.bf16.mxu0 0
  %373 = vmatmul.mubr.bf16.gmra.mrb[0].mxu0 %v302
  %v374 = vpop.f32.mrb[0].mxu0
  %v375 = vadd.f32 0.0, %v374
  %v376 = vpop.f32.mrb[0].mxu0
  %v377 = vpop.f32.mrb[0].mxu0
  %v378 = vadd.f32 0.0, %v377
  %v379 = vpop.f32.mrb[0].mxu0
  %380 = vmatprep.mubr.bf16.mxu0 0
  %381 = vmatmul.mubr.bf16.gmra.mrb[0].mxu0 %v305
  %v382 = vpop.f32.mrb[0].mxu0
  %v383 = vadd.f32 0.0, %v382
  %v384 = vpop.f32.mrb[0].mxu0
  %v385 = vpop.f32.mrb[0].mxu0
  %v386 = vadd.f32 0.0, %v385
  %v387 = vpop.f32.mrb[0].mxu0
  %388 = vmatprep.mubr.bf16.mxu0 0
  %389 = vmatmul.mubr.bf16.gmra.mrb[0].mxu0 %v308
  %v390 = vpop.f32.mrb[0].mxu0
  %v391 = vadd.f32 0.0, %v390
  %v392 = vpop.f32.mrb[0].mxu0
  %v393 = vpop.f32.mrb[0].mxu0
  %v394 = vadd.f32 0.0, %v393
  %v395 = vpop.f32.mrb[0].mxu0
  %396 = vmatprep.mubr.bf16.mxu0 0
  %397 = vmatmul.mubr.bf16.gmra.mrb[0].mxu0 %v311
  %v398 = vpop.f32.mrb[0].mxu0
  %v399 = vadd.f32 0.0, %v398
  %v400 = vpop.f32.mrb[0].mxu0
  %v401 = vpop.f32.mrb[0].mxu0
  %v402 = vadd.f32 0.0, %v401
  %v403 = vpop.f32.mrb[0].mxu0
  %404 = vmatprep.mubr.bf16.mxu0 0
  %405 = vmatmul.mubr.bf16.gmra.mrb[0].mxu0 %v314
  %v406 = vpop.f32.mrb[0].mxu0
  %v407 = vadd.f32 0.0, %v406
  %v408 = vpop.f32.mrb[0].mxu0
  %v409 = vpop.f32.mrb[0].mxu0
  %v410 = vadd.f32 0.0, %v409
  %v411 = vpop.f32.mrb[0].mxu0
  %412 = vdwg.mxu0
  %v413 = vpack.c.bf16 %v354, %v351
  %v414 = vpack.c.bf16 %v362, %v359
  %v415 = vpack.c.bf16 %v370, %v367
  %v416 = vpack.c.bf16 %v378, %v375
  %v417 = vpack.c.bf16 %v386, %v383
  %v418 = vpack.c.bf16 %v394, %v391
  %v419 = vpack.c.bf16 %v402, %v399
  %v420 = vpack.c.bf16 %v410, %v407
  %v421 = vld [vmem:[%s3] sm:$0xf]
  %v422 = vld [vmem:[%s3 + $0x4] sm:$0xf]
  %v425 = vunpack.c.l.b16 %v421
  %v426 = vunpack.c.l.b16 %v422
  %v427 = vpack.c.b16 %v426, %v425
  %v430 = vsel %vm291, %v275, 0
  %v433 = vsel %vm291, %v276, 0
  %v436 = vsel %vm291, %v277, 0
  %v439 = vsel %vm291, %v278, 0
  %v442 = vsel %vm291, %v279, 0
  %v445 = vsel %vm291, %v280, 0
  %v448 = vsel %vm291, %v281, 0
  %v451 = vsel %vm291, %v282, 0
  %453 = vmatprep.subr.bf16.mxu0 0
  %454 = vmatpush1.bf16.msra.mxu0 %v427
  %455 = vmatprep.subr.bf16.mxu0 0
  %456 = vmatpush1.bf16.msra.mxu0 0
  %457 = vmatprep.subr.bf16.mxu0 0
  %458 = vmatpush1.bf16.msra.mxu0 0
  %459 = vmatprep.subr.bf16.mxu0 0
  %460 = vmatpush1.bf16.msra.mxu0 0
  %461 = vmatprep.subr.bf16.mxu0 0
  %462 = vmatpush1.bf16.msra.mxu0 0
  %463 = vmatprep.subr.bf16.mxu0 0
  %464 = vmatpush1.bf16.msra.mxu0 0
  %465 = vmatprep.subr.bf16.mxu0 0
  %466 = vmatpush1.bf16.msra.mxu0 0
  %467 = vmatprep.subr.bf16.mxu0 0
  %468 = vmatpush1.bf16.msra.mxu0 0
  %469 = vmatprep.subr.bf16.mxu0 0
  %470 = vmatpush1.bf16.msra.mxu0 0
  %471 = vmatprep.subr.bf16.mxu0 0
  %472 = vmatpush1.bf16.msra.mxu0 0
  %473 = vmatprep.subr.bf16.mxu0 0
  %474 = vmatpush1.bf16.msra.mxu0 0
  %475 = vmatprep.subr.bf16.mxu0 0
  %476 = vmatpush1.bf16.msra.mxu0 0
  %477 = vmatprep.subr.bf16.mxu0 0
  %478 = vmatpush1.bf16.msra.mxu0 0
  %479 = vmatprep.subr.bf16.mxu0 0
  %480 = vmatpush1.bf16.msra.mxu0 0
  %481 = vmatprep.subr.bf16.mxu0 0
  %482 = vmatpush1.bf16.msra.mxu0 0
  %483 = vmatprep.subr.bf16.mxu0 0
  %484 = vmatpush1.bf16.msra.mxu0 0
  %485 = vmatprep.mubr.bf16.mxu0 0
  %486 = vmatmul.mubr.bf16.gmra.mrb[0].mxu0 %v430
  %v487 = vpop.f32.mrb[0].mxu0
  %v488 = vadd.f32 0.0, %v487
  %v489 = vpop.f32.mrb[0].mxu0
  %v490 = vpop.f32.mrb[0].mxu0
  %v491 = vadd.f32 0.0, %v490
  %v492 = vpop.f32.mrb[0].mxu0
  %493 = vmatprep.mubr.bf16.mxu0 0
  %494 = vmatmul.mubr.bf16.gmra.mrb[0].mxu0 %v433
  %v495 = vpop.f32.mrb[0].mxu0
  %v496 = vadd.f32 0.0, %v495
  %v497 = vpop.f32.mrb[0].mxu0
  %v498 = vpop.f32.mrb[0].mxu0
  %v499 = vadd.f32 0.0, %v498
  %v500 = vpop.f32.mrb[0].mxu0
  %501 = vmatprep.mubr.bf16.mxu0 0
  %502 = vmatmul.mubr.bf16.gmra.mrb[0].mxu0 %v436
  %v503 = vpop.f32.mrb[0].mxu0
  %v504 = vadd.f32 0.0, %v503
  %v505 = vpop.f32.mrb[0].mxu0
  %v506 = vpop.f32.mrb[0].mxu0
  %v507 = vadd.f32 0.0, %v506
  %v508 = vpop.f32.mrb[0].mxu0
  %509 = vmatprep.mubr.bf16.mxu0 0
  %510 = vmatmul.mubr.bf16.gmra.mrb[0].mxu0 %v439
  %v511 = vpop.f32.mrb[0].mxu0
  %v512 = vadd.f32 0.0, %v511
  %v513 = vpop.f32.mrb[0].mxu0
  %v514 = vpop.f32.mrb[0].mxu0
  %v515 = vadd.f32 0.0, %v514
  %v516 = vpop.f32.mrb[0].mxu0
  %517 = vmatprep.mubr.bf16.mxu0 0
  %518 = vmatmul.mubr.bf16.gmra.mrb[0].mxu0 %v442
  %v519 = vpop.f32.mrb[0].mxu0
  %v520 = vadd.f32 0.0, %v519
  %v521 = vpop.f32.mrb[0].mxu0
  %v522 = vpop.f32.mrb[0].mxu0
  %v523 = vadd.f32 0.0, %v522
  %v524 = vpop.f32.mrb[0].mxu0
  %525 = vmatprep.mubr.bf16.mxu0 0
  %526 = vmatmul.mubr.bf16.gmra.mrb[0].mxu0 %v445
  %v527 = vpop.f32.mrb[0].mxu0
  %v528 = vadd.f32 0.0, %v527
  %v529 = vpop.f32.mrb[0].mxu0
  %v530 = vpop.f32.mrb[0].mxu0
  %v531 = vadd.f32 0.0, %v530
  %v532 = vpop.f32.mrb[0].mxu0
  %533 = vmatprep.mubr.bf16.mxu0 0
  %534 = vmatmul.mubr.bf16.gmra.mrb[0].mxu0 %v448
  %v535 = vpop.f32.mrb[0].mxu0
  %v536 = vadd.f32 0.0, %v535
  %v537 = vpop.f32.mrb[0].mxu0
  %v538 = vpop.f32.mrb[0].mxu0
  %v539 = vadd.f32 0.0, %v538
  %v540 = vpop.f32.mrb[0].mxu0
  %541 = vmatprep.mubr.bf16.mxu0 0
  %542 = vmatmul.mubr.bf16.gmra.mrb[0].mxu0 %v451
  %v543 = vpop.f32.mrb[0].mxu0
  %v544 = vadd.f32 0.0, %v543
  %v545 = vpop.f32.mrb[0].mxu0
  %v546 = vpop.f32.mrb[0].mxu0
  %v547 = vadd.f32 0.0, %v546
  %v548 = vpop.f32.mrb[0].mxu0
  %549 = vdwg.mxu0
  %v550 = vpack.c.bf16 %v491, %v488
  %v551 = vpack.c.bf16 %v499, %v496
  %v552 = vpack.c.bf16 %v507, %v504
  %v553 = vpack.c.bf16 %v515, %v512
  %v554 = vpack.c.bf16 %v523, %v520
  %v555 = vpack.c.bf16 %v531, %v528
  %v556 = vpack.c.bf16 %v539, %v536
  %v557 = vpack.c.bf16 %v547, %v544
  %v558 = vld [vmem:[%s4] sm:$0xf]
  %v559 = vld [vmem:[%s4 + $0x4] sm:$0xf]
  %v560 = vld [vmem:[%s4 + $0x8] sm:$0xf]
  %v561 = vld [vmem:[%s4 + $0xc] sm:$0xf]
  %v562 = vld [vmem:[%s5] sm:$0xf]
  %v563 = vld [vmem:[%s5 + $0x4] sm:$0xf]
  %v564 = vld [vmem:[%s5 + $0x8] sm:$0xf]
  %v565 = vld [vmem:[%s5 + $0xc] sm:$0xf]
  %v570 = vunpack.c.l.b16 %v562
  %v571 = vunpack.c.l.b16 %v563
  %v572 = vunpack.c.l.b16 %v564
  %v573 = vunpack.c.l.b16 %v565
  %v574 = vpack.c.b16 %v571, %v570
  %v575 = vpack.c.b16 %v573, %v572
  %vm576 = vcmask 261120
  %v578 = vsel %vm576, %v574, 0
  %v581 = vsel %vm576, %v575, 0
  %v584 = vsel %vm576, %v550, 0
  %v587 = vsel %vm576, %v551, 0
  %v590 = vsel %vm576, %v552, 0
  %v593 = vsel %vm576, %v553, 0
  %v596 = vsel %vm576, %v554, 0
  %v599 = vsel %vm576, %v555, 0
  %v602 = vsel %vm576, %v556, 0
  %v605 = vsel %vm576, %v557, 0
  %607 = vmatprep.subr.bf16.mxu0 0
  %608 = vmatpush1.bf16.xpose.msra.mxu0 %v584
  %609 = vmatprep.subr.bf16.mxu0 0
  %610 = vmatpush1.bf16.xpose.msra.mxu0 %v587
  %611 = vmatprep.subr.bf16.mxu0 0
  %612 = vmatpush1.bf16.xpose.msra.mxu0 %v590
  %613 = vmatprep.subr.bf16.mxu0 0
  %614 = vmatpush1.bf16.xpose.msra.mxu0 %v593
  %615 = vmatprep.subr.bf16.mxu0 0
  %616 = vmatpush1.bf16.xpose.msra.mxu0 %v596
  %617 = vmatprep.subr.bf16.mxu0 0
  %618 = vmatpush1.bf16.xpose.msra.mxu0 %v599
  %619 = vmatprep.subr.bf16.mxu0 0
  %620 = vmatpush1.bf16.xpose.msra.mxu0 %v602
  %621 = vmatprep.subr.bf16.mxu0 0
  %622 = vmatpush1.bf16.xpose.msra.mxu0 %v605
  %623 = vmatprep.subr.bf16.mxu0 0
  %624 = vmatpush1.bf16.xpose.msra.mxu0 0
  %625 = vmatprep.subr.bf16.mxu0 0
  %626 = vmatpush1.bf16.xpose.msra.mxu0 0
  %627 = vmatprep.subr.bf16.mxu0 0
  %628 = vmatpush1.bf16.xpose.msra.mxu0 0
  %629 = vmatprep.subr.bf16.mxu0 0
  %630 = vmatpush1.bf16.xpose.msra.mxu0 0
  %631 = vmatprep.subr.bf16.mxu0 0
  %632 = vmatpush1.bf16.xpose.msra.mxu0 0
  %633 = vmatprep.subr.bf16.mxu0 0
  %634 = vmatpush1.bf16.xpose.msra.mxu0 0
  %635 = vmatprep.subr.bf16.mxu0 0
  %636 = vmatpush1.bf16.xpose.msra.mxu0 0
  %637 = vmatprep.subr.bf16.mxu0 0
  %638 = vmatpush1.bf16.xpose.msra.mxu0 0
  %639 = vmatprep.mubr.bf16.mxu0 0
  %640 = vmatmul.mubr.bf16.gmra.mrb[0].mxu0 %v578
  %v641 = vpop.f32.mrb[0].mxu0
  %v642 = vadd.f32 0.0, %v641
  %v643 = vpop.f32.mrb[0].mxu0
  %v644 = vpop.f32.mrb[0].mxu0
  %v645 = vadd.f32 0.0, %v644
  %v646 = vpop.f32.mrb[0].mxu0
  %647 = vmatprep.mubr.bf16.mxu0 0
  %648 = vmatmul.mubr.bf16.gmra.mrb[0].mxu0 %v581
  %v649 = vpop.f32.mrb[0].mxu0
  %v650 = vadd.f32 0.0, %v649
  %v651 = vpop.f32.mrb[0].mxu0
  %v652 = vpop.f32.mrb[0].mxu0
  %v653 = vadd.f32 0.0, %v652
  %v654 = vpop.f32.mrb[0].mxu0
  %655 = vdwg.mxu0
  %v660 = vunpack.c.l.b16 %v558
  %v661 = vunpack.c.l.b16 %v559
  %v662 = vunpack.c.l.b16 %v560
  %v663 = vunpack.c.l.b16 %v561
  %v664 = vpack.c.b16 %v661, %v660
  %v665 = vpack.c.b16 %v663, %v662
  %v667 = vsel %vm576, %v664, 0
  %v670 = vsel %vm576, %v665, 0
  %v673 = vsel %vm576, %v413, 0
  %v676 = vsel %vm576, %v414, 0
  %v679 = vsel %vm576, %v415, 0
  %v682 = vsel %vm576, %v416, 0
  %v685 = vsel %vm576, %v417, 0
  %v688 = vsel %vm576, %v418, 0
  %v691 = vsel %vm576, %v419, 0
  %v694 = vsel %vm576, %v420, 0
  %696 = vmatprep.subr.bf16.mxu0 0
  %697 = vmatpush1.bf16.xpose.msra.mxu0 %v673
  %698 = vmatprep.subr.bf16.mxu0 0
  %699 = vmatpush1.bf16.xpose.msra.mxu0 %v676
  %700 = vmatprep.subr.bf16.mxu0 0
  %701 = vmatpush1.bf16.xpose.msra.mxu0 %v679
  %702 = vmatprep.subr.bf16.mxu0 0
  %703 = vmatpush1.bf16.xpose.msra.mxu0 %v682
  %704 = vmatprep.subr.bf16.mxu0 0
  %705 = vmatpush1.bf16.xpose.msra.mxu0 %v685
  %706 = vmatprep.subr.bf16.mxu0 0
  %707 = vmatpush1.bf16.xpose.msra.mxu0 %v688
  %708 = vmatprep.subr.bf16.mxu0 0
  %709 = vmatpush1.bf16.xpose.msra.mxu0 %v691
  %710 = vmatprep.subr.bf16.mxu0 0
  %711 = vmatpush1.bf16.xpose.msra.mxu0 %v694
  %712 = vmatprep.subr.bf16.mxu0 0
  %713 = vmatpush1.bf16.xpose.msra.mxu0 0
  %714 = vmatprep.subr.bf16.mxu0 0
  %715 = vmatpush1.bf16.xpose.msra.mxu0 0
  %716 = vmatprep.subr.bf16.mxu0 0
  %717 = vmatpush1.bf16.xpose.msra.mxu0 0
  %718 = vmatprep.subr.bf16.mxu0 0
  %719 = vmatpush1.bf16.xpose.msra.mxu0 0
  %720 = vmatprep.subr.bf16.mxu0 0
  %721 = vmatpush1.bf16.xpose.msra.mxu0 0
  %722 = vmatprep.subr.bf16.mxu0 0
  %723 = vmatpush1.bf16.xpose.msra.mxu0 0
  %724 = vmatprep.subr.bf16.mxu0 0
  %725 = vmatpush1.bf16.xpose.msra.mxu0 0
  %726 = vmatprep.subr.bf16.mxu0 0
  %727 = vmatpush1.bf16.xpose.msra.mxu0 0
  %728 = vmatprep.mubr.bf16.mxu0 0
  %729 = vmatmul.mubr.bf16.gmra.mrb[0].mxu0 %v667
  %v730 = vpop.f32.mrb[0].mxu0
  %v731 = vadd.f32 %v642, %v730
  %v732 = vpop.f32.mrb[0].mxu0
  %v733 = vpop.f32.mrb[0].mxu0
  %v734 = vadd.f32 %v645, %v733
  %v735 = vpop.f32.mrb[0].mxu0
  %736 = vmatprep.mubr.bf16.mxu0 0
  %737 = vmatmul.mubr.bf16.gmra.mrb[0].mxu0 %v670
  %v738 = vpop.f32.mrb[0].mxu0
  %v739 = vadd.f32 %v650, %v738
  %v740 = vpop.f32.mrb[0].mxu0
  %v741 = vpop.f32.mrb[0].mxu0
  %v742 = vadd.f32 %v653, %v741
  %v743 = vpop.f32.mrb[0].mxu0
  %744 = vdwg.mxu0
  %v745 = vld [vmem:[%s6] sm:$0xff]
  %v746 = vld [vmem:[%s6 + $0x8] sm:$0xff]
  %v747 = vld [vmem:[%s6 + $0x10] sm:$0xff]
  %v748 = vld [vmem:[%s6 + $0x18] sm:$0xff]
  %750 = vset.pattern.permute.xlu0 0
  %751 = vperm.xlu0 %750, %v745
  %v752 = vpop.permute.xlu0 %751
  %755 = vset.pattern.permute.xlu0 0
  %756 = vperm.xlu0 %755, %v746
  %v757 = vpop.permute.xlu0 %756
  %760 = vset.pattern.permute.xlu0 0
  %761 = vperm.xlu0 %760, %v747
  %v762 = vpop.permute.xlu0 %761
  %765 = vset.pattern.permute.xlu0 0
  %766 = vperm.xlu0 %765, %v748
  %v767 = vpop.permute.xlu0 %766
  %v769 = vadd.f32 %v731, %v752
  %v770 = vadd.f32 %v734, %v757
  %v771 = vadd.f32 %v739, %v762
  %v772 = vadd.f32 %v742, %v767
  %v773 = vmax.f32 %v769, 0.0
  %v774 = vmax.f32 %v770, 0.0
  %v775 = vmax.f32 %v771, 0.0
  %v776 = vmax.f32 %v772, 0.0
  %v777 = vld [vmem:[%s7] sm:$0xf]
  %v778 = vld [vmem:[%s7 + $0x4] sm:$0xf]
  %v779 = vpack.c.bf16 %v774, %v773
  %v780 = vpack.c.bf16 %v776, %v775
  %v781 = vld [vmem:[%s8] sm:$0xff]
  %v782 = vld [vmem:[%s8 + $0x8] sm:$0xff]
  %784 = vset.pattern.permute.xlu0 0
  %785 = vperm.xlu0 %784, %v781
  %v786 = vpop.permute.xlu0 %785
  %789 = vset.pattern.permute.xlu0 0
  %790 = vperm.xlu0 %789, %v782
  %v791 = vpop.permute.xlu0 %790
  %v795 = vunpack.c.l.b16 %v777
  %v796 = vunpack.c.l.b16 %v778
  %v797 = vpack.c.b16 %v796, %v795
  %v799 = vsel %vm576, %v797, 0
  %801 = vmatprep.subr.bf16.mxu0 0
  %802 = vmatpush1.bf16.msra.mxu0 %v779
  %803 = vmatprep.subr.bf16.mxu0 0
  %804 = vmatpush1.bf16.msra.mxu0 %v780
  %805 = vmatprep.subr.bf16.mxu0 0
  %806 = vmatpush1.bf16.msra.mxu0 0
  %807 = vmatprep.subr.bf16.mxu0 0
  %808 = vmatpush1.bf16.msra.mxu0 0
  %809 = vmatprep.subr.bf16.mxu0 0
  %810 = vmatpush1.bf16.msra.mxu0 0
  %811 = vmatprep.subr.bf16.mxu0 0
  %812 = vmatpush1.bf16.msra.mxu0 0
  %813 = vmatprep.subr.bf16.mxu0 0
  %814 = vmatpush1.bf16.msra.mxu0 0
  %815 = vmatprep.subr.bf16.mxu0 0
  %816 = vmatpush1.bf16.msra.mxu0 0
  %817 = vmatprep.subr.bf16.mxu0 0
  %818 = vmatpush1.bf16.msra.mxu0 0
  %819 = vmatprep.subr.bf16.mxu0 0
  %820 = vmatpush1.bf16.msra.mxu0 0
  %821 = vmatprep.subr.bf16.mxu0 0
  %822 = vmatpush1.bf16.msra.mxu0 0
  %823 = vmatprep.subr.bf16.mxu0 0
  %824 = vmatpush1.bf16.msra.mxu0 0
  %825 = vmatprep.subr.bf16.mxu0 0
  %826 = vmatpush1.bf16.msra.mxu0 0
  %827 = vmatprep.subr.bf16.mxu0 0
  %828 = vmatpush1.bf16.msra.mxu0 0
  %829 = vmatprep.subr.bf16.mxu0 0
  %830 = vmatpush1.bf16.msra.mxu0 0
  %831 = vmatprep.subr.bf16.mxu0 0
  %832 = vmatpush1.bf16.msra.mxu0 0
  %833 = vmatprep.mubr.bf16.mxu0 0
  %834 = vmatmul.mubr.bf16.gmra.mrb[0].mxu0 %v799
  %v835 = vpop.f32.mrb[0].mxu0
  %v836 = vadd.f32 %v786, %v835
  %v837 = vpop.f32.mrb[0].mxu0
  %v838 = vpop.f32.mrb[0].mxu0
  %v839 = vadd.f32 %v791, %v838
  %v840 = vpop.f32.mrb[0].mxu0
  %841 = vdwg.mxu0
  %v842 = vmax.f32 %v836, 0.0
  %v843 = vmax.f32 %v839, 0.0
  %v844 = vld [vmem:[%s9] sm:$0xff]
  %v845 = vld [vmem:[%s9 + $0x8] sm:$0xff]
  %847 = vset.pattern.permute.xlu0 0
  %848 = vperm.xlu0 %847, %v844
  %v849 = vpop.permute.xlu0 %848
  %852 = vset.pattern.permute.xlu0 0
  %853 = vperm.xlu0 %852, %v845
  %v854 = vpop.permute.xlu0 %853
  %v856 = vmul.f32 %v849, %v842
  %v857 = vmul.f32 %v854, %v843
  %v858 = vadd.f32 %v856, %v857
  %v859 = vrot.slane %v858, 4
  %v860 = vadd.f32 %v858, %v859
  %v861 = vrot.slane %v860, 2
  %v862 = vadd.f32 %v860, %v861
  %v863 = vrot.slane %v862, 1
  %v864 = vadd.f32 %v862, %v863
  %v865 = vld [vmem:[#allocation2] sm:$0x1]
  %867 = vset.pattern.permute.xlu0 0
  %868 = vperm.xlu0 %867, %v865
  %v869 = vpop.permute.xlu0 %868
  %v871 = vlaneseq
  %v872 = vshrl.u32 %v871, 7
  %v873 = vsub.s32 0, %v872
  %v874 = vrot.slane %v869, %v873
  %v875 = vadd.f32 %v864, %v874
  %876 = vst [vmem:[%s11] sm:$0x1] %v875
  // Predicated region
  $region46: #{mlp_forward.1} parent=0 // pred_check
    _
  $region47: #{mlp_forward.1} parent=0 // pred_check_branch
    %878 = sbr.rel (0) target = $region49
  $region48: #{mlp_forward.1} parent=0 // pred_region
    _
  $region49: #{mlp_forward.1} parent=0 // pred_fallthru
    _
  // Predicated region
  $region50: #{mlp_forward.1} parent=0 // pred_check
    _
  $region51: #{mlp_forward.1} parent=0 // pred_check_branch
    %880 = sbr.rel (0) target = $region53
  $region52: #{mlp_forward.1} parent=0 // pred_region
    _
  $region53: #{mlp_forward.1} parent=0 // pred_fallthru
    _

</llo_original>
